<compile_context>
chip_gen: v7x
topology: tpu7x:2x2x1
jax: 0.10.0
libtpu: 0.0.40
codegen_flags: <defaults>
</compile_context>

<pallas_src>
import functools
import math

import jax
import jax.numpy as jnp
from jax import lax
from jax.experimental import pallas as pl
from jax.experimental.pallas import tpu as pltpu

LN_EPS = 1e-5  # torch.nn.LayerNorm default

_TM_PREF = 512              # aggregation output-row tile
_TK_PREF = 2048             # aggregation reduction tile (power-of-two x 128)
_RT_PREF = 1024             # projection row tile
_H_RESIDENT_MAX = 8 << 20   # keep H VMEM-resident for A@H when below this


# ----------------------------------------------------------------------------
# tiling helpers
# ----------------------------------------------------------------------------
def _round_up(x, m):
    return ((x + m - 1) // m) * m


def _divisor_tile(total, pref):
    """Largest multiple of 128 dividing `total` (positive multiple of 128), <= pref."""
    assert total > 0 and total % 128 == 0
    t = max(128, min(pref, total) - (min(pref, total) % 128))
    while total % t:
        t -= 128
    return t


def _choose_row_tile(n, pref=_TM_PREF):
    """Row tile (multiple of 128, <= pref) aiming for >= 2 row tiles (megacore)."""
    n_blk = _round_up(n, 128) // 128
    tm_blk = max(1, min(pref // 128, n_blk // 2 if n_blk >= 2 else 1))
    tm = 128 * tm_blk
    return tm, _round_up(n, tm)


def _choose_red_tile(n, pref=_TK_PREF):
    """Reduction tile (power-of-two x 128). Pads n up only if overhead is modest."""
    npad_min = _round_up(n, 128)
    slack = max(128, npad_min // 4)
    tk = 128
    for cand in (2048, 1024, 512, 256):
        if cand <= pref and _round_up(n, cand) - npad_min <= slack:
            tk = cand
            break
    return tk, _round_up(n, tk)


def _proj_row_pref(cin, pref=_RT_PREF):
    """Cap the projection row tile so the double-buffered f32 X tile stays ~<= 8 MiB."""
    cap = (8 << 20) // max(1, 2 * cin * 4)
    cap = max(128, (cap // 128) * 128)
    return min(pref, cap)


def _vmem_limit(est_bytes):
    return int(min(48 << 20, max(16 << 20, 2 * est_bytes + (2 << 20))))


def _pad_rows(x, rows):
    n = x.shape[0]
    if rows == n:
        return x
    return jnp.pad(x, ((0, rows - n), (0, 0)))


# ----------------------------------------------------------------------------
# Pallas kernels
# ----------------------------------------------------------------------------
def _ln_rows(x, gamma, beta, cout_real):
    """Masked two-pass LayerNorm over the (zero-padded) channel axis of a tile."""
    lane = lax.broadcasted_iota(jnp.int32, x.shape, x.ndim - 1)
    mask = lane < cout_real
    inv_c = 1.0 / float(cout_real)
    mu = jnp.sum(x, axis=-1, keepdims=True) * inv_c
    centered = jnp.where(mask, x - mu, 0.0)          # exact stats: padded lanes -> 0
    var = jnp.sum(centered * centered, axis=-1, keepdims=True) * inv_c
    return centered * lax.rsqrt(var + LN_EPS) * gamma + beta


def _proj_kernel(x_ref, w_ref, h_ref):
    """H = X @ W (f32 accumulate on the MXU, stored bf16 for the A@H stage)."""
    h_ref[...] = jnp.dot(x_ref[...], w_ref[...],
                         preferred_element_type=jnp.float32).astype(h_ref.dtype)


def _proj_ln_kernel(x_ref, w_ref, g_ref, b_ref, o_ref, *, cout_real):
    """out = LayerNorm(X @ W) * gamma + beta  (LN fused into the projection)."""
    h = jnp.dot(x_ref[...], w_ref[...], preferred_element_type=jnp.float32)
    o_ref[...] = _ln_rows(h, g_ref[...], b_ref[...], cout_real).astype(o_ref.dtype)


def _agg_ln_kernel(adj_ref, h_ref, b_ref, g_ref, beta_ref, o_ref, *,
                   tk, h_resident, cout_real):
    """o += A_tile @ H_chunk; at k == last: o = LN(o + bias) * gamma + beta."""
    k = pl.program_id(1)

    @pl.when(k == 0)
    def _():
        o_ref[...] = jnp.zeros_like(o_ref)

    if h_resident:
        off = pl.multiple_of(k * tk, tk)
        h_tile = h_ref[pl.ds(off, tk), :]
    else:
        h_tile = h_ref[...]

    o_ref[...] += jnp.dot(adj_ref[...], h_tile, preferred_element_type=jnp.float32)

    @pl.when(k == pl.num_programs(1) - 1)
    def _():
        x = o_ref[...] + b_ref[...]
        o_ref[...] = _ln_rows(x, g_ref[...], beta_ref[...],
                              cout_real).astype(o_ref.dtype)


# ----------------------------------------------------------------------------
# pallas_call wrappers
# ----------------------------------------------------------------------------
def project(x, w_t):
    """X [rows, Cin] @ W [Cin, Cout_pad] -> bf16 H [rows, Cout_pad]."""
    rows, cin = x.shape
    cout_pad = w_t.shape[1]
    rt = _divisor_tile(rows, _proj_row_pref(cin))
    est = 2 * rt * cin * 4 + 2 * cin * cout_pad * 4 + 2 * rt * cout_pad * 2
    return pl.pallas_call(
        _proj_kernel,
        out_shape=jax.ShapeDtypeStruct((rows, cout_pad), jnp.bfloat16),
        grid=(rows // rt,),
        in_specs=[
            pl.BlockSpec((rt, cin), lambda i: (i, 0)),
            pl.BlockSpec((cin, cout_pad), lambda i: (0, 0)),    # W resident
        ],
        out_specs=pl.BlockSpec((rt, cout_pad), lambda i: (i, 0)),
        compiler_params=pltpu.CompilerParams(
            dimension_semantics=("parallel",),
            vmem_limit_bytes=_vmem_limit(est)),
    )(x, w_t)


def project_layernorm(x, w_t, gamma, beta, cout_real):
    """out = LayerNorm(X @ W) * gamma + beta, fused (no H round trip through HBM)."""
    n, cin = x.shape
    cout_pad = w_t.shape[1]
    rt = min(_proj_row_pref(cin), _round_up(n, 128))
    rows = _round_up(n, rt)
    xp = _pad_rows(x, rows)
    kernel = functools.partial(_proj_ln_kernel, cout_real=cout_real)
    est = 2 * rt * cin * 4 + 2 * cin * cout_pad * 4 + 2 * rt * cout_pad * 4
    return pl.pallas_call(
        kernel,
        out_shape=jax.ShapeDtypeStruct((rows, cout_pad), jnp.float32),
        grid=(rows // rt,),
        in_specs=[
            pl.BlockSpec((rt, cin), lambda i: (i, 0)),
            pl.BlockSpec((cin, cout_pad), lambda i: (0, 0)),
            pl.BlockSpec((1, cout_pad), lambda i: (0, 0)),
            pl.BlockSpec((1, cout_pad), lambda i: (0, 0)),
        ],
        out_specs=pl.BlockSpec((rt, cout_pad), lambda i: (i, 0)),
        compiler_params=pltpu.CompilerParams(
            dimension_semantics=("parallel",),
            vmem_limit_bytes=_vmem_limit(est)),
    )(xp, w_t, gamma, beta)


def aggregate_layernorm(adj, h, bias, gamma, beta, cout_real, tm, tk):
    """out = LayerNorm(adj @ h + bias) * gamma + beta, tiled (row, k) grid."""
    npad_m, npad_k = adj.shape
    cout_pad = h.shape[1]
    h_bytes = h.size * h.dtype.itemsize
    h_resident = h_bytes <= _H_RESIDENT_MAX

    if h_resident:
        # full-H block with constant index map: fetched once, stays in VMEM.
        h_spec = pl.BlockSpec((npad_k, cout_pad), lambda i, k: (0, 0))
        h_vmem = 2 * h_bytes
        h_traffic = h_bytes
    else:
        # fall back to streaming (tk, cout_pad) tiles per k step.
        h_spec = pl.BlockSpec((tk, cout_pad), lambda i, k: (k, 0))
        h_vmem = 2 * tk * cout_pad * h.dtype.itemsize
        h_traffic = h_bytes * (npad_m // tm)

    kernel = functools.partial(_agg_ln_kernel, tk=tk, h_resident=h_resident,
                               cout_real=cout_real)

    est = (2 * tm * tk * adj.dtype.itemsize + h_vmem
           + 2 * tm * cout_pad * 4 + 6 * cout_pad * 4)
    flops = 2 * npad_m * npad_k * cout_pad
    bytes_accessed = (adj.size * adj.dtype.itemsize + h_traffic
                      + (bias.size + gamma.size + beta.size) * 4
                      + npad_m * cout_pad * 4)

    return pl.pallas_call(
        kernel,
        out_shape=jax.ShapeDtypeStruct((npad_m, cout_pad), jnp.float32),
        grid=(npad_m // tm, npad_k // tk),
        in_specs=[
            pl.BlockSpec((tm, tk), lambda i, k: (i, k)),        # adjacency (bf16)
            h_spec,                                             # H (bf16)
            pl.BlockSpec((1, cout_pad), lambda i, k: (0, 0)),   # bias
            pl.BlockSpec((1, cout_pad), lambda i, k: (0, 0)),   # gamma
            pl.BlockSpec((1, cout_pad), lambda i, k: (0, 0)),   # beta
        ],
        out_specs=pl.BlockSpec((tm, cout_pad), lambda i, k: (i, 0)),
        compiler_params=pltpu.CompilerParams(
            dimension_semantics=("parallel", "arbitrary"),
            vmem_limit_bytes=_vmem_limit(est)),
        cost_estimate=pl.CostEstimate(
            flops=flops, transcendentals=npad_m, bytes_accessed=bytes_accessed),
    )(adj, h, bias, gamma, beta)


# ----------------------------------------------------------------------------
# GNNConv module equivalent (conv_name='gcn_conv', norm='LayerNorm', self_loop=True)
# ----------------------------------------------------------------------------
class GNNConvPallas:
    def __init__(self, in_channels, out_channels, key):
        self.cin = in_channels
        self.cout = out_channels
        self.cout_pad = _round_up(out_channels, 128)     # lane-dense channel dim

        # GCNConv.lin: glorot-uniform weight [out, in], no bias.
        limit = math.sqrt(6.0 / (in_channels + out_channels))
        w = jax.random.uniform(key, (out_channels, in_channels),
                               jnp.float32, -limit, limit)
        self.w_t = jnp.zeros((in_channels, self.cout_pad),
                             jnp.float32).at[:, :out_channels].set(w.T)

        # GCNConv bias (zero-init); LayerNorm affine params. Padded channels of
        # gamma stay 0 so padded output lanes are exact zeros.
        self.bias = jnp.zeros((1, self.cout_pad), jnp.float32)
        ones_pad = jnp.zeros((1, self.cout_pad),
                             jnp.float32).at[:, :out_channels].set(1.0)
        self.gamma, self.beta = ones_pad, jnp.zeros((1, self.cout_pad), jnp.float32)
        self.gamma_, self.beta_ = ones_pad, jnp.zeros((1, self.cout_pad), jnp.float32)

    @staticmethod
    def _dense_gcn_adj(edge_index, num_nodes, rows_pad, cols_pad):
        """bf16 D^{-1/2}(A+I)D^{-1/2}, zero-padded to [rows_pad, cols_pad] (JAX glue)."""
        src, dst = edge_index[0], edge_index[1]
        loops = jnp.arange(num_nodes, dtype=src.dtype)
        src = jnp.concatenate([src, loops])
        dst = jnp.concatenate([dst, loops])
        deg = jnp.zeros((num_nodes,), jnp.float32).at[dst].add(1.0)
        dinv = jnp.where(deg > 0, lax.rsqrt(deg), 0.0)
        w = (dinv[src] * dinv[dst]).astype(jnp.bfloat16)
        # Built directly in bf16: no f32 N^2 temporary + cast round trip.
        # TODO(synk): for genuinely large sparse graphs replace this dense O(N^2)
        # build with a scalar-prefetch neighbor-gather kernel (PrefetchScalarGridSpec).
        adj = jnp.zeros((rows_pad, cols_pad), jnp.bfloat16)
        return adj.at[dst, src].add(w)    # A[i, j] = norm for edge j -> i

    def _gcn_branch(self, x, edge_index):
        n = x.shape[0]
        tm, npad_m = _choose_row_tile(n)
        tk, npad_k = _choose_red_tile(n)
        h = project(_pad_rows(x, npad_k), self.w_t)          # [npad_k, cout_pad] bf16
        adj = self._dense_gcn_adj(edge_index, n, npad_m, npad_k)
        out = aggregate_layernorm(adj, h, self.bias, self.gamma, self.beta,
                                  self.cout, tm, tk)
        return out[:n, :self.cout]

    def __call__(self, xs, edge_index):
        if isinstance(xs, (list, tuple)):
            x0, x1 = xs
            out0 = self._gcn_branch(x0, edge_index)
            out1 = project_layernorm(x1, self.w_t, self.gamma_, self.beta_,
                                     self.cout)
            return out0, out1[:x1.shape[0], :self.cout]
        return self._gcn_branch(xs, edge_index)


# ----------------------------------------------------------------------------
if __name__ == "__main__":
    key = jax.random.PRNGKey(0)
    N, C_IN, C_OUT = 16, 16, 32

    k_x, k_x1, k_p = jax.random.split(key, 3)
    x = jax.random.normal(k_x, (N, C_IN), jnp.float32)
    x1 = jax.random.normal(k_x1, (N, C_IN), jnp.float32)

    # deterministic ring graph (undirected), edge_index: [2, E]
    s = jnp.arange(N, dtype=jnp.int32)
    d = (s + 1) % N
    edge_index = jnp.stack([jnp.concatenate([s, d]),
                            jnp.concatenate([d, s])], axis=0)

    model = GNNConvPallas(C_IN, C_OUT, k_p)

    out = model(x, edge_index)                 # tensor branch
    out_pair = model([x, x1], edge_index)      # list branch
    jax.block_until_ready(out)
    jax.block_until_ready(out_pair)

    # ---- pure-JAX f32 reference (loose tol: kernel uses bf16 adj/H) ----
    def _ln(y):
        mu = y.mean(-1, keepdims=True)
        var = ((y - mu) ** 2).mean(-1, keepdims=True)
        return (y - mu) / jnp.sqrt(var + LN_EPS)

    w_real = model.w_t[:, :C_OUT]
    loops = jnp.arange(N, dtype=jnp.int32)
    src_l = jnp.concatenate([edge_index[0], loops])
    dst_l = jnp.concatenate([edge_index[1], loops])
    deg = jnp.zeros((N,), jnp.float32).at[dst_l].add(1.0)
    dinv = jnp.where(deg > 0, lax.rsqrt(deg), 0.0)
    adj_ref = jnp.zeros((N, N), jnp.float32).at[dst_l, src_l].add(
        dinv[src_l] * dinv[dst_l])
    ref0 = _ln(adj_ref @ (x @ w_real))
    ref1 = _ln(x1 @ w_real)

    assert out.shape == (N, C_OUT)
    assert out_pair[0].shape == (N, C_OUT) and out_pair[1].shape == (N, C_OUT)
    assert bool(jnp.all(jnp.isfinite(out)))
    assert bool(jnp.all(jnp.isfinite(out_pair[0])))
    assert bool(jnp.all(jnp.isfinite(out_pair[1])))
    assert float(jnp.max(jnp.abs(out - ref0))) < 0.1
    assert float(jnp.max(jnp.abs(out_pair[0] - ref0))) < 0.1
    assert float(jnp.max(jnp.abs(out_pair[1] - ref1))) < 0.1
    print("KERNEL_OK")
</pallas_src>

<mosaic_0001>
module attributes {stable_mosaic.version = 11 : i64} {
  func.func @_proj_kernel(%arg0: i32, %arg1: memref<256x16xf32, #tpu.memory_space<vmem>>, %arg2: memref<16x128xf32, #tpu.memory_space<vmem>>, %arg3: memref<256x128xbf16, #tpu.memory_space<vmem>>) attributes {dimension_semantics = [#tpu.dimension_semantics<parallel>], iteration_bounds = array<i64: 1>, scalar_prefetch = 0 : i64, scratch_operands = 0 : i64, tpu.core_type = #tpu.core_type<tc>, window_params = [{transform_indices = @transform_0, window_bounds = array<i64: 256, 16>}, {pipeline_mode = #tpu.pipeline_mode<synchronous>, transform_indices = @transform_1, window_bounds = array<i64: 16, 128>}, {transform_indices = @transform_2, window_bounds = array<i64: 256, 128>}]} {
    %c0 = arith.constant 0 : index
    %c0_0 = arith.constant 0 : index
    %0 = vector.load %arg1[%c0, %c0_0] : memref<256x16xf32, #tpu.memory_space<vmem>>, vector<256x16xf32>
    %c0_1 = arith.constant 0 : index
    %c0_2 = arith.constant 0 : index
    %1 = vector.load %arg2[%c0_1, %c0_2] : memref<16x128xf32, #tpu.memory_space<vmem>>, vector<16x128xf32>
    %cst = arith.constant dense<0.000000e+00> : vector<256x128xf32>
    %2 = tpu.matmul %0, %1, %cst {dimension_numbers = #tpu.dot_dimension_numbers<[1], [0], [0], [1], [0, 0, 1, 1], [], []>} : vector<256x16xf32>, vector<16x128xf32>, vector<256x128xf32> -> vector<256x128xf32>
    %3 = arith.truncf %2 : vector<256x128xf32> to vector<256x128xbf16>
    %c0_3 = arith.constant 0 : index
    %c0_4 = arith.constant 0 : index
    %4 = vector.load %arg3[%c0_3, %c0_4] : memref<256x128xbf16, #tpu.memory_space<vmem>>, vector<256x128xbf16>
    tpu.vector_store %arg3[%c0_3, %c0_4], %3 {strides = array<i32>} : memref<256x128xbf16, #tpu.memory_space<vmem>>, vector<256x128xbf16>,
    return
  }
  func.func @transform_0(%arg0: i32) -> (i32, i32) {
    %c0_i32 = arith.constant 0 : i32
    %c0_i32_0 = arith.constant 0 : i32
    return %arg0, %c0_i32 : i32, i32
  }
  func.func @transform_1(%arg0: i32) -> (i32, i32) {
    %c0_i32 = arith.constant 0 : i32
    %c0_i32_0 = arith.constant 0 : i32
    %c0_i32_1 = arith.constant 0 : i32
    return %c0_i32, %c0_i32_0 : i32, i32
  }
  func.func @transform_2(%arg0: i32) -> (i32, i32) {
    %c0_i32 = arith.constant 0 : i32
    %c0_i32_0 = arith.constant 0 : i32
    return %arg0, %c0_i32 : i32, i32
  }
}

</mosaic_0001>

<llo_original>
// kernel: tpu_custom_call.1
$region0: #{tpu_custom_call.1}
  #allocation0 [shape = 'u32[]', space=smem, size = 0x4, offset = 0x4, fixed_abs, tag = 'smem constant byte address 0x4 - core index']
  #allocation1 [shape = 'u32[144,128]{1,0:T(1,128)}', space=vmem, size = 0x12000, scoped, tag = 'internal scratch']
  %s0 = inlined_call_operand.vmem [shape: f32[256,16], index: 0, kind: input, shape index: {}]
  %s1 = inlined_call_operand.vmem [shape: f32[16,128], index: 1, kind: input, shape index: {}]
  %s2 = inlined_call_operand.hbm [shape: bf16[256,128], index: 2, kind: output, shape index: {}]
  %s3 = sld [smem:[#allocation0]]
  $region18: #{tpu_custom_call.1} parent=0
    _
  %s5 = ssub.s32 1, %s3
  %s6 = scalar_select 0, %s5, %s3
  $region1: #{tpu_custom_call.1} parent=0
    #allocation2 [shape = 'u8[65536]{0}', space=vmem, size = 0x10000, scoped, tag = 'output window, operand 0, single buffered']
    #allocation3 [shape = 's32[1]{0}', space=sflag, size = 0x4, scoped, tag = 'scoped memory for tpu_custom_call.1']
    %7 = vsyncpa [#allocation3], 0
    // Predicated region
    $region2: #{tpu_custom_call.1} parent=1 // pred_check
      _
    $region3: #{tpu_custom_call.1} parent=1 // pred_check_branch
      %9 = sbr.rel (0) target = $region5
    $region4: #{tpu_custom_call.1} parent=1 // pred_region
      _
    $region5: #{tpu_custom_call.1} parent=1 // pred_fallthru
      _
    // Predicated region
    $region6: #{tpu_custom_call.1} parent=1 // pred_check
      _
    $region7: #{tpu_custom_call.1} parent=1 // pred_check_branch
      %11 = sbr.rel (0) target = $region9
    $region8: #{tpu_custom_call.1} parent=1 // pred_region
      _
    $region9: #{tpu_custom_call.1} parent=1 // pred_fallthru
      _
    %v12 = vld [vmem:[%s0] sm:$0xff]
    %v13 = vld [vmem:[%s0 + $0x8] sm:$0xff]
    %v14 = vld [vmem:[%s0 + $0x10] sm:$0xff]
    %v15 = vld [vmem:[%s0 + $0x18] sm:$0xff]
    %v16 = vld [vmem:[%s0 + $0x20] sm:$0xff]
    %v17 = vld [vmem:[%s0 + $0x28] sm:$0xff]
    %v18 = vld [vmem:[%s0 + $0x30] sm:$0xff]
    %v19 = vld [vmem:[%s0 + $0x38] sm:$0xff]
    %v20 = vld [vmem:[%s0 + $0x40] sm:$0xff]
    %v21 = vld [vmem:[%s0 + $0x48] sm:$0xff]
    %v22 = vld [vmem:[%s0 + $0x50] sm:$0xff]
    %v23 = vld [vmem:[%s0 + $0x58] sm:$0xff]
    %v24 = vld [vmem:[%s0 + $0x60] sm:$0xff]
    %v25 = vld [vmem:[%s0 + $0x68] sm:$0xff]
    %v26 = vld [vmem:[%s0 + $0x70] sm:$0xff]
    %v27 = vld [vmem:[%s0 + $0x78] sm:$0xff]
    %v28 = vld [vmem:[%s0 + $0x80] sm:$0xff]
    %v29 = vld [vmem:[%s0 + $0x88] sm:$0xff]
    %v30 = vld [vmem:[%s0 + $0x90] sm:$0xff]
    %v31 = vld [vmem:[%s0 + $0x98] sm:$0xff]
    %v32 = vld [vmem:[%s0 + $0xa0] sm:$0xff]
    %v33 = vld [vmem:[%s0 + $0xa8] sm:$0xff]
    %v34 = vld [vmem:[%s0 + $0xb0] sm:$0xff]
    %v35 = vld [vmem:[%s0 + $0xb8] sm:$0xff]
    %v36 = vld [vmem:[%s0 + $0xc0] sm:$0xff]
    %v37 = vld [vmem:[%s0 + $0xc8] sm:$0xff]
    %v38 = vld [vmem:[%s0 + $0xd0] sm:$0xff]
    %v39 = vld [vmem:[%s0 + $0xd8] sm:$0xff]
    %v40 = vld [vmem:[%s0 + $0xe0] sm:$0xff]
    %v41 = vld [vmem:[%s0 + $0xe8] sm:$0xff]
    %v42 = vld [vmem:[%s0 + $0xf0] sm:$0xff]
    %v43 = vld [vmem:[%s0 + $0xf8] sm:$0xff]
    %v44 = vld [vmem:[%s1] sm:$0xff]
    %v45 = vld [vmem:[%s1 + $0x8] sm:$0xff]
    %vm46 = vcmask 130048
    %v48 = vsel %vm46, %v12, 0
    %v51 = vsel %vm46, %v13, 0
    %v54 = vsel %vm46, %v14, 0
    %v57 = vsel %vm46, %v15, 0
    %v60 = vsel %vm46, %v16, 0
    %v63 = vsel %vm46, %v17, 0
    %v66 = vsel %vm46, %v18, 0
    %v69 = vsel %vm46, %v19, 0
    %v72 = vsel %vm46, %v20, 0
    %v75 = vsel %vm46, %v21, 0
    %v78 = vsel %vm46, %v22, 0
    %v81 = vsel %vm46, %v23, 0
    %v84 = vsel %vm46, %v24, 0
    %v87 = vsel %vm46, %v25, 0
    %v90 = vsel %vm46, %v26, 0
    %v93 = vsel %vm46, %v27, 0
    %v96 = vsel %vm46, %v28, 0
    %v99 = vsel %vm46, %v29, 0
    %v102 = vsel %vm46, %v30, 0
    %v105 = vsel %vm46, %v31, 0
    %v108 = vsel %vm46, %v32, 0
    %v111 = vsel %vm46, %v33, 0
    %v114 = vsel %vm46, %v34, 0
    %v117 = vsel %vm46, %v35, 0
    %v120 = vsel %vm46, %v36, 0
    %v123 = vsel %vm46, %v37, 0
    %v126 = vsel %vm46, %v38, 0
    %v129 = vsel %vm46, %v39, 0
    %v132 = vsel %vm46, %v40, 0
    %v135 = vsel %vm46, %v41, 0
    %v138 = vsel %vm46, %v42, 0
    %v141 = vsel %vm46, %v43, 0
    %143 = vmatprep.subr.mxu0 0.0
    %144 = vmatpush1.msra.mxu0 %v44
    %145 = vmatprep.subr.mxu0 0.0
    %146 = vmatpush1.msra.mxu0 %v45
    %147 = vmatprep.subr.mxu0 0.0
    %148 = vmatpush1.msra.mxu0 0.0
    %149 = vmatprep.subr.mxu0 0.0
    %150 = vmatpush1.msra.mxu0 0.0
    %151 = vmatprep.subr.mxu0 0.0
    %152 = vmatpush1.msra.mxu0 0.0
    %153 = vmatprep.subr.mxu0 0.0
    %154 = vmatpush1.msra.mxu0 0.0
    %155 = vmatprep.subr.mxu0 0.0
    %156 = vmatpush1.msra.mxu0 0.0
    %157 = vmatprep.subr.mxu0 0.0
    %158 = vmatpush1.msra.mxu0 0.0
    %159 = vmatprep.subr.mxu0 0.0
    %160 = vmatpush1.msra.mxu0 0.0
    %161 = vmatprep.subr.mxu0 0.0
    %162 = vmatpush1.msra.mxu0 0.0
    %163 = vmatprep.subr.mxu0 0.0
    %164 = vmatpush1.msra.mxu0 0.0
    %165 = vmatprep.subr.mxu0 0.0
    %166 = vmatpush1.msra.mxu0 0.0
    %167 = vmatprep.subr.mxu0 0.0
    %168 = vmatpush1.msra.mxu0 0.0
    %169 = vmatprep.subr.mxu0 0.0
    %170 = vmatpush1.msra.mxu0 0.0
    %171 = vmatprep.subr.mxu0 0.0
    %172 = vmatpush1.msra.mxu0 0.0
    %173 = vmatprep.subr.mxu0 0.0
    %174 = vmatpush1.msra.mxu0 0.0
    %175 = vmatprep.subr.mxu0 0.0
    %176 = vmatpush1.msra.mxu0 0.0
    %177 = vmatprep.subr.mxu0 0.0
    %178 = vmatpush1.msra.mxu0 0.0
    %179 = vmatprep.subr.mxu0 0.0
    %180 = vmatpush1.msra.mxu0 0.0
    %181 = vmatprep.subr.mxu0 0.0
    %182 = vmatpush1.msra.mxu0 0.0
    %183 = vmatprep.subr.mxu0 0.0
    %184 = vmatpush1.msra.mxu0 0.0
    %185 = vmatprep.subr.mxu0 0.0
    %186 = vmatpush1.msra.mxu0 0.0
    %187 = vmatprep.subr.mxu0 0.0
    %188 = vmatpush1.msra.mxu0 0.0
    %189 = vmatprep.subr.mxu0 0.0
    %190 = vmatpush1.msra.mxu0 0.0
    %191 = vmatprep.subr.mxu0 0.0
    %192 = vmatpush1.msra.mxu0 0.0
    %193 = vmatprep.subr.mxu0 0.0
    %194 = vmatpush1.msra.mxu0 0.0
    %195 = vmatprep.subr.mxu0 0.0
    %196 = vmatpush1.msra.mxu0 0.0
    %197 = vmatprep.subr.mxu0 0.0
    %198 = vmatpush1.msra.mxu0 0.0
    %199 = vmatprep.subr.mxu0 0.0
    %200 = vmatpush1.msra.mxu0 0.0
    %201 = vmatprep.subr.mxu0 0.0
    %202 = vmatpush1.msra.mxu0 0.0
    %203 = vmatprep.subr.mxu0 0.0
    %204 = vmatpush1.msra.mxu0 0.0
    %205 = vmatprep.subr.mxu0 0.0
    %206 = vmatpush1.msra.mxu0 0.0
    %207 = vmatprep.mubr.f32.mxu0 0.0
    %208 = vmatmul.mubr.f32.gmra.mrb[0].mxu0 %v48
    %v209 = vpop.f32.mrb[0].mxu0
    %v210 = vadd.f32 0.0, %v209
    %v211 = vpop.f32.mrb[0].mxu0
    %212 = vmatprep.mubr.f32.mxu0 0.0
    %213 = vmatmul.mubr.f32.gmra.mrb[0].mxu0 %v51
    %v214 = vpop.f32.mrb[0].mxu0
    %v215 = vadd.f32 0.0, %v214
    %v216 = vpop.f32.mrb[0].mxu0
    %217 = vmatprep.mubr.f32.mxu0 0.0
    %218 = vmatmul.mubr.f32.gmra.mrb[0].mxu0 %v54
    %v219 = vpop.f32.mrb[0].mxu0
    %v220 = vadd.f32 0.0, %v219
    %v221 = vpop.f32.mrb[0].mxu0
    %222 = vmatprep.mubr.f32.mxu0 0.0
    %223 = vmatmul.mubr.f32.gmra.mrb[0].mxu0 %v57
    %v224 = vpop.f32.mrb[0].mxu0
    %v225 = vadd.f32 0.0, %v224
    %v226 = vpop.f32.mrb[0].mxu0
    %227 = vmatprep.mubr.f32.mxu0 0.0
    %228 = vmatmul.mubr.f32.gmra.mrb[0].mxu0 %v60
    %v229 = vpop.f32.mrb[0].mxu0
    %v230 = vadd.f32 0.0, %v229
    %v231 = vpop.f32.mrb[0].mxu0
    %232 = vmatprep.mubr.f32.mxu0 0.0
    %233 = vmatmul.mubr.f32.gmra.mrb[0].mxu0 %v63
    %v234 = vpop.f32.mrb[0].mxu0
    %v235 = vadd.f32 0.0, %v234
    %v236 = vpop.f32.mrb[0].mxu0
    %237 = vmatprep.mubr.f32.mxu0 0.0
    %238 = vmatmul.mubr.f32.gmra.mrb[0].mxu0 %v66
    %v239 = vpop.f32.mrb[0].mxu0
    %v240 = vadd.f32 0.0, %v239
    %v241 = vpop.f32.mrb[0].mxu0
    %242 = vmatprep.mubr.f32.mxu0 0.0
    %243 = vmatmul.mubr.f32.gmra.mrb[0].mxu0 %v69
    %v244 = vpop.f32.mrb[0].mxu0
    %v245 = vadd.f32 0.0, %v244
    %v246 = vpop.f32.mrb[0].mxu0
    %247 = vmatprep.mubr.f32.mxu0 0.0
    %248 = vmatmul.mubr.f32.gmra.mrb[0].mxu0 %v72
    %v249 = vpop.f32.mrb[0].mxu0
    %v250 = vadd.f32 0.0, %v249
    %v251 = vpop.f32.mrb[0].mxu0
    %252 = vmatprep.mubr.f32.mxu0 0.0
    %253 = vmatmul.mubr.f32.gmra.mrb[0].mxu0 %v75
    %v254 = vpop.f32.mrb[0].mxu0
    %v255 = vadd.f32 0.0, %v254
    %v256 = vpop.f32.mrb[0].mxu0
    %257 = vmatprep.mubr.f32.mxu0 0.0
    %258 = vmatmul.mubr.f32.gmra.mrb[0].mxu0 %v78
    %v259 = vpop.f32.mrb[0].mxu0
    %v260 = vadd.f32 0.0, %v259
    %v261 = vpop.f32.mrb[0].mxu0
    %262 = vmatprep.mubr.f32.mxu0 0.0
    %263 = vmatmul.mubr.f32.gmra.mrb[0].mxu0 %v81
    %v264 = vpop.f32.mrb[0].mxu0
    %v265 = vadd.f32 0.0, %v264
    %v266 = vpop.f32.mrb[0].mxu0
    %267 = vmatprep.mubr.f32.mxu0 0.0
    %268 = vmatmul.mubr.f32.gmra.mrb[0].mxu0 %v84
    %v269 = vpop.f32.mrb[0].mxu0
    %v270 = vadd.f32 0.0, %v269
    %v271 = vpop.f32.mrb[0].mxu0
    %272 = vmatprep.mubr.f32.mxu0 0.0
    %273 = vmatmul.mubr.f32.gmra.mrb[0].mxu0 %v87
    %v274 = vpop.f32.mrb[0].mxu0
    %v275 = vadd.f32 0.0, %v274
    %v276 = vpop.f32.mrb[0].mxu0
    %277 = vmatprep.mubr.f32.mxu0 0.0
    %278 = vmatmul.mubr.f32.gmra.mrb[0].mxu0 %v90
    %v279 = vpop.f32.mrb[0].mxu0
    %v280 = vadd.f32 0.0, %v279
    %v281 = vpop.f32.mrb[0].mxu0
    %282 = vmatprep.mubr.f32.mxu0 0.0
    %283 = vmatmul.mubr.f32.gmra.mrb[0].mxu0 %v93
    %v284 = vpop.f32.mrb[0].mxu0
    %v285 = vadd.f32 0.0, %v284
    %v286 = vpop.f32.mrb[0].mxu0
    %287 = vmatprep.mubr.f32.mxu0 0.0
    %288 = vmatmul.mubr.f32.gmra.mrb[0].mxu0 %v96
    %v289 = vpop.f32.mrb[0].mxu0
    %v290 = vadd.f32 0.0, %v289
    %v291 = vpop.f32.mrb[0].mxu0
    %292 = vmatprep.mubr.f32.mxu0 0.0
    %293 = vmatmul.mubr.f32.gmra.mrb[0].mxu0 %v99
    %v294 = vpop.f32.mrb[0].mxu0
    %v295 = vadd.f32 0.0, %v294
    %v296 = vpop.f32.mrb[0].mxu0
    %297 = vmatprep.mubr.f32.mxu0 0.0
    %298 = vmatmul.mubr.f32.gmra.mrb[0].mxu0 %v102
    %v299 = vpop.f32.mrb[0].mxu0
    %v300 = vadd.f32 0.0, %v299
    %v301 = vpop.f32.mrb[0].mxu0
    %302 = vmatprep.mubr.f32.mxu0 0.0
    %303 = vmatmul.mubr.f32.gmra.mrb[0].mxu0 %v105
    %v304 = vpop.f32.mrb[0].mxu0
    %v305 = vadd.f32 0.0, %v304
    %v306 = vpop.f32.mrb[0].mxu0
    %307 = vmatprep.mubr.f32.mxu0 0.0
    %308 = vmatmul.mubr.f32.gmra.mrb[0].mxu0 %v108
    %v309 = vpop.f32.mrb[0].mxu0
    %v310 = vadd.f32 0.0, %v309
    %v311 = vpop.f32.mrb[0].mxu0
    %312 = vmatprep.mubr.f32.mxu0 0.0
    %313 = vmatmul.mubr.f32.gmra.mrb[0].mxu0 %v111
    %v314 = vpop.f32.mrb[0].mxu0
    %v315 = vadd.f32 0.0, %v314
    %v316 = vpop.f32.mrb[0].mxu0
    %317 = vmatprep.mubr.f32.mxu0 0.0
    %318 = vmatmul.mubr.f32.gmra.mrb[0].mxu0 %v114
    %v319 = vpop.f32.mrb[0].mxu0
    %v320 = vadd.f32 0.0, %v319
    %v321 = vpop.f32.mrb[0].mxu0
    %322 = vmatprep.mubr.f32.mxu0 0.0
    %323 = vmatmul.mubr.f32.gmra.mrb[0].mxu0 %v117
    %v324 = vpop.f32.mrb[0].mxu0
    %v325 = vadd.f32 0.0, %v324
    %v326 = vpop.f32.mrb[0].mxu0
    %327 = vmatprep.mubr.f32.mxu0 0.0
    %328 = vmatmul.mubr.f32.gmra.mrb[0].mxu0 %v120
    %v329 = vpop.f32.mrb[0].mxu0
    %v330 = vadd.f32 0.0, %v329
    %v331 = vpop.f32.mrb[0].mxu0
    %332 = vmatprep.mubr.f32.mxu0 0.0
    %333 = vmatmul.mubr.f32.gmra.mrb[0].mxu0 %v123
    %v334 = vpop.f32.mrb[0].mxu0
    %v335 = vadd.f32 0.0, %v334
    %v336 = vpop.f32.mrb[0].mxu0
    %337 = vmatprep.mubr.f32.mxu0 0.0
    %338 = vmatmul.mubr.f32.gmra.mrb[0].mxu0 %v126
    %v339 = vpop.f32.mrb[0].mxu0
    %v340 = vadd.f32 0.0, %v339
    %v341 = vpop.f32.mrb[0].mxu0
    %342 = vmatprep.mubr.f32.mxu0 0.0
    %343 = vmatmul.mubr.f32.gmra.mrb[0].mxu0 %v129
    %v344 = vpop.f32.mrb[0].mxu0
    %v345 = vadd.f32 0.0, %v344
    %v346 = vpop.f32.mrb[0].mxu0
    %347 = vmatprep.mubr.f32.mxu0 0.0
    %348 = vmatmul.mubr.f32.gmra.mrb[0].mxu0 %v132
    %v349 = vpop.f32.mrb[0].mxu0
    %v350 = vadd.f32 0.0, %v349
    %v351 = vpop.f32.mrb[0].mxu0
    %352 = vmatprep.mubr.f32.mxu0 0.0
    %353 = vmatmul.mubr.f32.gmra.mrb[0].mxu0 %v135
    %v354 = vpop.f32.mrb[0].mxu0
    %v355 = vadd.f32 0.0, %v354
    %v356 = vpop.f32.mrb[0].mxu0
    %357 = vmatprep.mubr.f32.mxu0 0.0
    %358 = vmatmul.mubr.f32.gmra.mrb[0].mxu0 %v138
    %v359 = vpop.f32.mrb[0].mxu0
    %v360 = vadd.f32 0.0, %v359
    %v361 = vpop.f32.mrb[0].mxu0
    %362 = vmatprep.mubr.f32.mxu0 0.0
    %363 = vmatmul.mubr.f32.gmra.mrb[0].mxu0 %v141
    %v364 = vpop.f32.mrb[0].mxu0
    %v365 = vadd.f32 0.0, %v364
    %v366 = vpop.f32.mrb[0].mxu0
    %367 = vdwg.mxu0
    %v368 = vpack.c.bf16 %v215, %v210
    %v369 = vpack.c.bf16 %v225, %v220
    %v370 = vpack.c.bf16 %v235, %v230
    %v371 = vpack.c.bf16 %v245, %v240
    %v372 = vpack.c.bf16 %v255, %v250
    %v373 = vpack.c.bf16 %v265, %v260
    %v374 = vpack.c.bf16 %v275, %v270
    %v375 = vpack.c.bf16 %v285, %v280
    %v376 = vpack.c.bf16 %v295, %v290
    %v377 = vpack.c.bf16 %v305, %v300
    %v378 = vpack.c.bf16 %v315, %v310
    %v379 = vpack.c.bf16 %v325, %v320
    %v380 = vpack.c.bf16 %v335, %v330
    %v381 = vpack.c.bf16 %v345, %v340
    %v382 = vpack.c.bf16 %v355, %v350
    %v383 = vpack.c.bf16 %v365, %v360
    %v400 = vunpack.c.l.b16 %v368
    %v401 = vunpack.c.h.b16 %v368
    %v402 = vunpack.c.l.b16 %v369
    %v403 = vunpack.c.h.b16 %v369
    %v404 = vunpack.c.l.b16 %v370
    %v405 = vunpack.c.h.b16 %v370
    %v406 = vunpack.c.l.b16 %v371
    %v407 = vunpack.c.h.b16 %v371
    %v408 = vunpack.c.l.b16 %v372
    %v409 = vunpack.c.h.b16 %v372
    %v410 = vunpack.c.l.b16 %v373
    %v411 = vunpack.c.h.b16 %v373
    %v412 = vunpack.c.l.b16 %v374
    %v413 = vunpack.c.h.b16 %v374
    %v414 = vunpack.c.l.b16 %v375
    %v415 = vunpack.c.h.b16 %v375
    %v416 = vunpack.c.l.b16 %v376
    %v417 = vunpack.c.h.b16 %v376
    %v418 = vunpack.c.l.b16 %v377
    %v419 = vunpack.c.h.b16 %v377
    %v420 = vunpack.c.l.b16 %v378
    %v421 = vunpack.c.h.b16 %v378
    %v422 = vunpack.c.l.b16 %v379
    %v423 = vunpack.c.h.b16 %v379
    %v424 = vunpack.c.l.b16 %v380
    %v425 = vunpack.c.h.b16 %v380
    %v426 = vunpack.c.l.b16 %v381
    %v427 = vunpack.c.h.b16 %v381
    %v428 = vunpack.c.l.b16 %v382
    %v429 = vunpack.c.h.b16 %v382
    %v430 = vunpack.c.l.b16 %v383
    %v431 = vunpack.c.h.b16 %v383
    %v432 = vpack.c.b16 %v400, %v400
    %v433 = vpack.c.b16 %v401, %v401
    %v434 = vpack.c.b16 %v402, %v402
    %v435 = vpack.c.b16 %v403, %v403
    %v436 = vpack.c.b16 %v404, %v404
    %v437 = vpack.c.b16 %v405, %v405
    %v438 = vpack.c.b16 %v406, %v406
    %v439 = vpack.c.b16 %v407, %v407
    %v440 = vpack.c.b16 %v408, %v408
    %v441 = vpack.c.b16 %v409, %v409
    %v442 = vpack.c.b16 %v410, %v410
    %v443 = vpack.c.b16 %v411, %v411
    %v444 = vpack.c.b16 %v412, %v412
    %v445 = vpack.c.b16 %v413, %v413
    %v446 = vpack.c.b16 %v414, %v414
    %v447 = vpack.c.b16 %v415, %v415
    %v448 = vpack.c.b16 %v416, %v416
    %v449 = vpack.c.b16 %v417, %v417
    %v450 = vpack.c.b16 %v418, %v418
    %v451 = vpack.c.b16 %v419, %v419
    %v452 = vpack.c.b16 %v420, %v420
    %v453 = vpack.c.b16 %v421, %v421
    %v454 = vpack.c.b16 %v422, %v422
    %v455 = vpack.c.b16 %v423, %v423
    %v456 = vpack.c.b16 %v424, %v424
    %v457 = vpack.c.b16 %v425, %v425
    %v458 = vpack.c.b16 %v426, %v426
    %v459 = vpack.c.b16 %v427, %v427
    %v460 = vpack.c.b16 %v428, %v428
    %v461 = vpack.c.b16 %v429, %v429
    %v462 = vpack.c.b16 %v430, %v430
    %v463 = vpack.c.b16 %v431, %v431
    %496 = vst [vmem:[#allocation2] sm:$0xf] %v432
    %497 = vst [vmem:[#allocation2 + $0x4] sm:$0xf] %v433
    %498 = vst [vmem:[#allocation2 + $0x8] sm:$0xf] %v434
    %499 = vst [vmem:[#allocation2 + $0xc] sm:$0xf] %v435
    %500 = vst [vmem:[#allocation2 + $0x10] sm:$0xf] %v436
    %501 = vst [vmem:[#allocation2 + $0x14] sm:$0xf] %v437
    %502 = vst [vmem:[#allocation2 + $0x18] sm:$0xf] %v438
    %503 = vst [vmem:[#allocation2 + $0x1c] sm:$0xf] %v439
    %504 = vst [vmem:[#allocation2 + $0x20] sm:$0xf] %v440
    %505 = vst [vmem:[#allocation2 + $0x24] sm:$0xf] %v441
    %506 = vst [vmem:[#allocation2 + $0x28] sm:$0xf] %v442
    %507 = vst [vmem:[#allocation2 + $0x2c] sm:$0xf] %v443
    %508 = vst [vmem:[#allocation2 + $0x30] sm:$0xf] %v444
    %509 = vst [vmem:[#allocation2 + $0x34] sm:$0xf] %v445
    %510 = vst [vmem:[#allocation2 + $0x38] sm:$0xf] %v446
    %511 = vst [vmem:[#allocation2 + $0x3c] sm:$0xf] %v447
    %512 = vst [vmem:[#allocation2 + $0x40] sm:$0xf] %v448
    %513 = vst [vmem:[#allocation2 + $0x44] sm:$0xf] %v449
    %514 = vst [vmem:[#allocation2 + $0x48] sm:$0xf] %v450
    %515 = vst [vmem:[#allocation2 + $0x4c] sm:$0xf] %v451
    %516 = vst [vmem:[#allocation2 + $0x50] sm:$0xf] %v452
    %517 = vst [vmem:[#allocation2 + $0x54] sm:$0xf] %v453
    %518 = vst [vmem:[#allocation2 + $0x58] sm:$0xf] %v454
    %519 = vst [vmem:[#allocation2 + $0x5c] sm:$0xf] %v455
    %520 = vst [vmem:[#allocation2 + $0x60] sm:$0xf] %v456
    %521 = vst [vmem:[#allocation2 + $0x64] sm:$0xf] %v457
    %522 = vst [vmem:[#allocation2 + $0x68] sm:$0xf] %v458
    %523 = vst [vmem:[#allocation2 + $0x6c] sm:$0xf] %v459
    %524 = vst [vmem:[#allocation2 + $0x70] sm:$0xf] %v460
    %525 = vst [vmem:[#allocation2 + $0x74] sm:$0xf] %v461
    %526 = vst [vmem:[#allocation2 + $0x78] sm:$0xf] %v462
    %527 = vst [vmem:[#allocation2 + $0x7c] sm:$0xf] %v463
    // Predicated region
    $region10: #{tpu_custom_call.1} parent=1 // pred_check
      _
    $region11: #{tpu_custom_call.1} parent=1 // pred_check_branch
      %529 = sbr.rel (0) target = $region13
    $region12: #{tpu_custom_call.1} parent=1 // pred_region
      %s531 = ssub.s32 2048, 2048
      %532 = vsyncadd [#allocation3], %s531
      %s533 = sshll.u32 [#allocation2], 4
      %s534 = int_to_ptr.vmem [resolvable:$true] %s533
      %539 = dma.vmem_to_hbm [thread:$0]  %s534, 2048, %s2, [#allocation3], 64, 64, 4
    $region13: #{tpu_custom_call.1} parent=1 // pred_fallthru
      _
    // Predicated region
    $region14: #{tpu_custom_call.1} parent=1 // pred_check
      _
    $region15: #{tpu_custom_call.1} parent=1 // pred_check_branch
      %541 = sbr.rel (0) target = $region17
    $region16: #{tpu_custom_call.1} parent=1 // pred_region
      %542 = dma.done [#allocation3], 2048
    $region17: #{tpu_custom_call.1} parent=1 // pred_fallthru
      _
    %543 = vsyncpa [#allocation3], 1

</llo_original>
